<compile_context>
chip_gen: v5e
topology: v5e:2x2
jax: 0.10.0
libtpu: 0.0.40
codegen_flags: <defaults>
</compile_context>

<pallas_src>
import functools
import math

import jax
import jax.numpy as jnp
from jax.experimental import pallas as pl
from jax.experimental.pallas import tpu as pltpu


# ----------------------------- helpers --------------------------------------

def _round_up(x, m):
    return ((x + m - 1) // m) * m


def _choose_pack(D, E, max_pack=32):
    """Rows packed per lane-row.  Prefer the smallest pack with BOTH pack*D and
    pack*E multiples of 128 (lane-dense loads AND stores); else lane-dense
    stores only; else pack=1."""
    for p in range(1, max_pack + 1):
        if (p * D) % 128 == 0 and (p * E) % 128 == 0:
            return p
    for p in range(1, max_pack + 1):
        if (p * E) % 128 == 0:
            return p
    # TODO(synk): emb_dim does not tile 128 lanes for any pack <= max_pack;
    #             falling back to pack=1 (masked partial-lane stores).
    return 1


def _block_diag(w, pack):
    """(k, n) -> (pack*k, pack*n) with `w` repeated on the diagonal blocks."""
    if pack == 1:
        return w
    return jnp.kron(jnp.eye(pack, dtype=w.dtype), w)


def _vmem_capacity_bytes():
    try:
        cap = int(pltpu.get_tpu_info().vmem_capacity_bytes)
        if cap > 0:
            return cap
    except Exception:
        pass
    return 64 * 2 ** 20  # conservative default (v7x per-core VMEM)


def _param_bytes(d_p, e_p, n_blocks):
    return (d_p * e_p * 2
            + max(n_blocks - 1, 0) * e_p * e_p * 2
            + n_blocks * e_p * 4)


def _per_row_bytes(d_p, e_p, out_bytes):
    # double-buffered in/out tiles + live f32/bf16 intermediates, per packed row
    return (2 * d_p * 4 + 2 * e_p * out_bytes
            + d_p * 4 + e_p * 4 + e_p * 2 + max(d_p, e_p) * 2)


def _choose_row_tile(packed_rows, d_p, e_p, n_blocks, out_bytes, vmem_cap,
                     min_steps=4, min_rows_per_step=512, max_rt_p=8192):
    """Largest packed-row tile that fits a generation-aware VMEM budget, split
    into >= min_steps grid steps when there is enough work so each TensorCore
    keeps its double-buffered DMA/compute overlap (important on v7x)."""
    budget = (vmem_cap * 3) // 8            # ~24 MiB on v7x, ~48 MiB on v5e/v6e
    avail = budget - 2 * _param_bytes(d_p, e_p, n_blocks)
    cap = max(8, min(max_rt_p,
                     (avail // _per_row_bytes(d_p, e_p, out_bytes)) // 8 * 8))
    steps = pl.cdiv(packed_rows, cap)
    if packed_rows >= min_steps * min_rows_per_step:
        steps = max(steps, min_steps)
    if steps <= 1:
        return packed_rows                   # single full block (small inputs)
    return _round_up(pl.cdiv(packed_rows, steps), 8)


# ----------------------------- kernel ----------------------------------------

def _encoder_kernel(n_blocks, has_rest, x_ref, *refs):
    """One grid step = one packed row tile through the whole MLP chain.

    x_ref:     (rt_p, pack*D)                 f32   packed input rows
    w0_ref:    (pack*D, pack*E)               bf16  block-diag first weight
    wrest_ref: (n_blocks-1, pE, pE)           bf16  block-diag hidden weights (optional)
    b_ref:     (n_blocks, pack*E)             f32   lane-tiled biases
    o_ref:     (rt_p, pack*E)                        packed output rows
    """
    if has_rest:
        w0_ref, wrest_ref, b_ref, o_ref = refs
    else:
        w0_ref, b_ref, o_ref = refs
        wrest_ref = None

    h = x_ref[...].astype(jnp.float32)
    for i in range(n_blocks):
        w = w0_ref[...] if i == 0 else wrest_ref[i - 1]
        acc = jnp.dot(h.astype(jnp.bfloat16), w,
                      preferred_element_type=jnp.float32)    # MXU, f32 accumulate
        h = jnp.maximum(acc + b_ref[pl.ds(i, 1), :], 0.0)    # VPU, f32 epilogue
    o_ref[...] = h.astype(o_ref.dtype)


# ----------------------------- wrapper ----------------------------------------

def prepare_encoder_params(weights, biases):
    """Build kernel-ready parameters ONCE (block-diagonal bf16 weights,
    lane-tiled f32 biases).  Cache and reuse across forward calls."""
    D = int(weights[0].shape[0])
    E = int(weights[-1].shape[1])
    n_blocks = len(weights)
    pack = _choose_pack(D, E)
    d_p, e_p = pack * D, pack * E

    w0 = _block_diag(jnp.asarray(weights[0], jnp.float32), pack).astype(jnp.bfloat16)
    if n_blocks > 1:
        w_rest = jnp.stack(
            [_block_diag(jnp.asarray(w, jnp.float32), pack) for w in weights[1:]]
        ).astype(jnp.bfloat16)
    else:
        w_rest = None                                   # no dummy buffer
    b_all = jnp.concatenate(
        [jnp.tile(jnp.asarray(b, jnp.float32).reshape(1, E), (1, pack))
         for b in biases], axis=0)                      # (n_blocks, e_p) f32

    return dict(D=D, E=E, n_blocks=n_blocks, pack=pack, d_p=d_p, e_p=e_p,
                w0=w0, w_rest=w_rest, b_all=b_all)


def vehicles_state_encoder(vehicles_state_information, params,
                           *, out_dtype=jnp.bfloat16, row_tile_packed=None):
    """Pallas forward pass.

    vehicles_state_information: (batch, num_vehicles, info_dim) float
    params: output of prepare_encoder_params
    returns: (batch, num_vehicles, emb_dim) in out_dtype
    """
    x = vehicles_state_information
    B, V, D = x.shape
    assert D == params["D"]
    E, n_blocks = params["E"], params["n_blocks"]
    pack, d_p, e_p = params["pack"], params["d_p"], params["e_p"]
    w0, w_rest, b_all = params["w0"], params["w_rest"], params["b_all"]
    has_rest = w_rest is not None

    rows = B * V
    rows_padded = _round_up(rows, pack)      # tiny pad: only to a `pack` multiple
    x2 = x.reshape(rows, D)
    if x2.dtype != jnp.float32:
        x2 = x2.astype(jnp.float32)
    if rows_padded != rows:
        x2 = jnp.pad(x2, ((0, rows_padded - rows), (0, 0)))
    packed_rows = rows_padded // pack
    x_packed = x2.reshape(packed_rows, d_p)  # byte-identical row-major reshape

    out_bytes = jnp.dtype(out_dtype).itemsize
    vmem_cap = _vmem_capacity_bytes()
    if row_tile_packed is None:
        rt_p = _choose_row_tile(packed_rows, d_p, e_p, n_blocks, out_bytes, vmem_cap)
    else:
        rt_p = min(int(row_tile_packed), packed_rows)
    num_steps = pl.cdiv(packed_rows, rt_p)

    footprint = (2 * _param_bytes(d_p, e_p, n_blocks)
                 + rt_p * _per_row_bytes(d_p, e_p, out_bytes))
    vmem_limit = int(min(vmem_cap, max(16 * 2 ** 20, footprint + 8 * 2 ** 20)))

    flops = 2 * packed_rows * (d_p * e_p + max(n_blocks - 1, 0) * e_p * e_p)
    bytes_accessed = (x_packed.size * 4 + packed_rows * e_p * out_bytes
                      + w0.size * 2 + (w_rest.size * 2 if has_rest else 0)
                      + b_all.size * 4)

    def _run(use_buffered_params):
        def param_spec(shape):
            nd = len(shape)
            idx = lambda i, _nd=nd: (0,) * _nd           # constant: resident in VMEM
            if use_buffered_params:
                # single-buffered parameters: no second copy, no per-step DMA
                return pl.BlockSpec(shape, idx, pipeline_mode=pl.Buffered(1))
            return pl.BlockSpec(shape, idx)

        in_specs = [pl.BlockSpec((rt_p, d_p), lambda i: (i, 0)),
                    param_spec(w0.shape)]
        args = [x_packed, w0]
        if has_rest:
            in_specs.append(param_spec(w_rest.shape))
            args.append(w_rest)
        in_specs.append(param_spec(b_all.shape))
        args.append(b_all)

        return pl.pallas_call(
            functools.partial(_encoder_kernel, n_blocks, has_rest),
            grid=(num_steps,),
            in_specs=in_specs,
            out_specs=pl.BlockSpec((rt_p, e_p), lambda i: (i, 0)),
            out_shape=jax.ShapeDtypeStruct((packed_rows, e_p), out_dtype),
            compiler_params=pltpu.CompilerParams(
                dimension_semantics=("parallel",),
                vmem_limit_bytes=vmem_limit),
            cost_estimate=pl.CostEstimate(flops=int(flops), transcendentals=0,
                                          bytes_accessed=int(bytes_accessed)),
        )(*args)

    try:
        out = _run(use_buffered_params=True)
    except Exception:
        # Fallback for jax versions without pipeline_mode=pl.Buffered(1) support.
        out = _run(use_buffered_params=False)

    # Unpack (byte-identical reshape), drop the padded rows.
    return out.reshape(rows_padded, E)[:rows].reshape(B, V, E)


# ----------------------------- reference & test ------------------------------

def init_params(key, info_dim, emb_dim, n_blocks):
    """Deterministic synthetic parameters (PyTorch-Linear-like uniform init)."""
    weights, biases = [], []
    in_dim = info_dim
    for _ in range(n_blocks):
        key, kw, kb = jax.random.split(key, 3)
        bound = 1.0 / math.sqrt(in_dim)
        w = jax.random.uniform(kw, (in_dim, emb_dim), jnp.float32,
                               minval=-bound, maxval=bound)
        b = jax.random.uniform(kb, (1, emb_dim), jnp.float32,
                               minval=-bound, maxval=bound)
        weights.append(w)
        biases.append(b)
        in_dim = emb_dim
    return weights, biases


def reference_forward(x, weights, biases):
    """Pure-JAX reference mirroring kernel numerics (bf16 matmul operands,
    f32 accumulation and epilogue) on the original, unpacked weights."""
    B, V, D = x.shape
    h = x.reshape(B * V, D).astype(jnp.float32)
    for w, b in zip(weights, biases):
        acc = jnp.dot(h.astype(jnp.bfloat16), w.astype(jnp.bfloat16),
                      preferred_element_type=jnp.float32)
        h = jnp.maximum(acc + b, 0.0)
    return h.reshape(B, V, -1)


if __name__ == "__main__":
    batch = 2
    num_vehicles = 8
    vehicles_state_information_dim = 16
    vehicles_state_embedding_dim = 32
    linear_blocks_number = 2

    key = jax.random.PRNGKey(0)
    key, kx = jax.random.split(key)
    x = jax.random.normal(
        kx, (batch, num_vehicles, vehicles_state_information_dim), jnp.float32)

    weights, biases = init_params(
        key, vehicles_state_information_dim,
        vehicles_state_embedding_dim, linear_blocks_number)

    # Parameters packed once (block-diag bf16 weights, lane-tiled biases), reused.
    params = prepare_encoder_params(weights, biases)

    out = vehicles_state_encoder(x, params)          # bf16 output
    out = jax.block_until_ready(out)

    ref = reference_forward(x, weights, biases)
    assert out.shape == (batch, num_vehicles, vehicles_state_embedding_dim)
    err = jnp.max(jnp.abs(out.astype(jnp.float32)
                          - ref.astype(jnp.bfloat16).astype(jnp.float32)))
    assert float(err) <= 2e-2, float(err)

    print("KERNEL_OK")
</pallas_src>

<mosaic_0001>
module attributes {stable_mosaic.version = 11 : i64} {
  func.func @_encoder_kernel(%arg0: i32, %arg1: memref<2x128xf32, #tpu.memory_space<vmem>>, %arg2: memref<128x256xbf16, #tpu.memory_space<vmem>>, %arg3: memref<1x256x256xbf16, #tpu.memory_space<vmem>>, %arg4: memref<2x256xf32, #tpu.memory_space<vmem>>, %arg5: memref<2x256xbf16, #tpu.memory_space<vmem>>) attributes {dimension_semantics = [#tpu.dimension_semantics<parallel>], iteration_bounds = array<i64: 1>, scalar_prefetch = 0 : i64, scratch_operands = 0 : i64, tpu.core_type = #tpu.core_type<tc>, window_params = [{transform_indices = @transform_0, window_bounds = array<i64: 2, 128>}, {pipeline_mode = #tpu.pipeline_mode<synchronous>, transform_indices = @transform_1, window_bounds = array<i64: 128, 256>}, {pipeline_mode = #tpu.pipeline_mode<synchronous>, transform_indices = @transform_2, window_bounds = array<i64: 1, 256, 256>}, {pipeline_mode = #tpu.pipeline_mode<synchronous>, transform_indices = @transform_3, window_bounds = array<i64: 2, 256>}, {transform_indices = @transform_4, window_bounds = array<i64: 2, 256>}]} {
    %c0 = arith.constant 0 : index
    %c0_0 = arith.constant 0 : index
    %0 = vector.load %arg1[%c0, %c0_0] : memref<2x128xf32, #tpu.memory_space<vmem>>, vector<2x128xf32>
    %c0_1 = arith.constant 0 : index
    %c0_2 = arith.constant 0 : index
    %1 = vector.load %arg2[%c0_1, %c0_2] : memref<128x256xbf16, #tpu.memory_space<vmem>>, vector<128x256xbf16>
    %2 = arith.truncf %0 : vector<2x128xf32> to vector<2x128xbf16>
    %cst = arith.constant dense<0.000000e+00> : vector<2x256xf32>
    %3 = tpu.matmul %2, %1, %cst {dimension_numbers = #tpu.dot_dimension_numbers<[1], [0], [0], [1], [0, 0, 1, 1], [], []>} : vector<2x128xbf16>, vector<128x256xbf16>, vector<2x256xf32> -> vector<2x256xf32>
    %c0_3 = arith.constant 0 : index
    %c0_4 = arith.constant 0 : index
    %4 = vector.load %arg4[%c0_3, %c0_4] : memref<2x256xf32, #tpu.memory_space<vmem>>, vector<1x256xf32>
    %5 = vector.broadcast %4 : vector<1x256xf32> to vector<2x256xf32>
    %6 = arith.addf %3, %5 : vector<2x256xf32>
    %cst_5 = arith.constant 0.000000e+00 : f32
    %7 = vector.broadcast %cst_5 : f32 to vector<2x256xf32>
    %8 = arith.maximumf %6, %7 : vector<2x256xf32>
    %c0_6 = arith.constant 0 : index
    %c0_7 = arith.constant 0 : index
    %c0_8 = arith.constant 0 : index
    %9 = vector.load %arg3[%c0_6, %c0_7, %c0_8] : memref<1x256x256xbf16, #tpu.memory_space<vmem>>, vector<1x256x256xbf16>
    %10 = vector.shape_cast %9 : vector<1x256x256xbf16> to vector<256x256xbf16>
    %11 = arith.truncf %8 : vector<2x256xf32> to vector<2x256xbf16>
    %cst_9 = arith.constant dense<0.000000e+00> : vector<2x256xf32>
    %12 = tpu.matmul %11, %10, %cst_9 {dimension_numbers = #tpu.dot_dimension_numbers<[1], [0], [0], [1], [0, 0, 1, 1], [], []>} : vector<2x256xbf16>, vector<256x256xbf16>, vector<2x256xf32> -> vector<2x256xf32>
    %c1 = arith.constant 1 : index
    %c0_10 = arith.constant 0 : index
    %13 = vector.load %arg4[%c1, %c0_10] : memref<2x256xf32, #tpu.memory_space<vmem>>, vector<1x256xf32>
    %14 = vector.broadcast %13 : vector<1x256xf32> to vector<2x256xf32>
    %15 = arith.addf %12, %14 : vector<2x256xf32>
    %cst_11 = arith.constant 0.000000e+00 : f32
    %16 = vector.broadcast %cst_11 : f32 to vector<2x256xf32>
    %17 = arith.maximumf %15, %16 : vector<2x256xf32>
    %18 = arith.truncf %17 : vector<2x256xf32> to vector<2x256xbf16>
    %c0_12 = arith.constant 0 : index
    %c0_13 = arith.constant 0 : index
    %19 = vector.load %arg5[%c0_12, %c0_13] : memref<2x256xbf16, #tpu.memory_space<vmem>>, vector<2x256xbf16>
    tpu.vector_store %arg5[%c0_12, %c0_13], %18 {strides = array<i32>} : memref<2x256xbf16, #tpu.memory_space<vmem>>, vector<2x256xbf16>,
    return
  }
  func.func @transform_0(%arg0: i32) -> (i32, i32) {
    %c0_i32 = arith.constant 0 : i32
    %c0_i32_0 = arith.constant 0 : i32
    return %arg0, %c0_i32 : i32, i32
  }
  func.func @transform_1(%arg0: i32) -> (i32, i32) {
    %c0_i32 = arith.constant 0 : i32
    %c0_i32_0 = arith.constant 0 : i32
    %c0_i32_1 = arith.constant 0 : i32
    return %c0_i32, %c0_i32_0 : i32, i32
  }
  func.func @transform_2(%arg0: i32) -> (i32, i32, i32) {
    %c0_i32 = arith.constant 0 : i32
    %c0_i32_0 = arith.constant 0 : i32
    %c0_i32_1 = arith.constant 0 : i32
    %c0_i32_2 = arith.constant 0 : i32
    return %c0_i32, %c0_i32_0, %c0_i32_1 : i32, i32, i32
  }
  func.func @transform_3(%arg0: i32) -> (i32, i32) {
    %c0_i32 = arith.constant 0 : i32
    %c0_i32_0 = arith.constant 0 : i32
    %c0_i32_1 = arith.constant 0 : i32
    return %c0_i32, %c0_i32_0 : i32, i32
  }
  func.func @transform_4(%arg0: i32) -> (i32, i32) {
    %c0_i32 = arith.constant 0 : i32
    %c0_i32_0 = arith.constant 0 : i32
    return %arg0, %c0_i32 : i32, i32
  }
}

module attributes {stable_mosaic.version = 11 : i64} {
  func.func @_encoder_kernel(%arg0: i32, %arg1: memref<2x128xf32, #tpu.memory_space<vmem>>, %arg2: memref<128x256xbf16, #tpu.memory_space<vmem>>, %arg3: memref<1x256x256xbf16, #tpu.memory_space<vmem>>, %arg4: memref<2x256xf32, #tpu.memory_space<vmem>>, %arg5: memref<2x256xbf16, #tpu.memory_space<vmem>>) attributes {dimension_semantics = [#tpu.dimension_semantics<parallel>], iteration_bounds = array<i64: 1>, scalar_prefetch = 0 : i64, scratch_operands = 0 : i64, tpu.core_type = #tpu.core_type<tc>, window_params = [{transform_indices = @transform_0, window_bounds = array<i64: 2, 128>}, {pipeline_mode = #tpu.pipeline_mode<synchronous>, transform_indices = @transform_1, window_bounds = array<i64: 128, 256>}, {pipeline_mode = #tpu.pipeline_mode<synchronous>, transform_indices = @transform_2, window_bounds = array<i64: 1, 256, 256>}, {pipeline_mode = #tpu.pipeline_mode<synchronous>, transform_indices = @transform_3, window_bounds = array<i64: 2, 256>}, {transform_indices = @transform_4, window_bounds = array<i64: 2, 256>}]} {
    %c0 = arith.constant 0 : index
    %c0_0 = arith.constant 0 : index
    %0 = vector.load %arg1[%c0, %c0_0] : memref<2x128xf32, #tpu.memory_space<vmem>>, vector<2x128xf32>
    %c0_1 = arith.constant 0 : index
    %c0_2 = arith.constant 0 : index
    %1 = vector.load %arg2[%c0_1, %c0_2] : memref<128x256xbf16, #tpu.memory_space<vmem>>, vector<128x256xbf16>
    %2 = arith.truncf %0 : vector<2x128xf32> to vector<2x128xbf16>
    %cst = arith.constant dense<0.000000e+00> : vector<2x256xf32>
    %3 = tpu.matmul %2, %1, %cst {dimension_numbers = #tpu.dot_dimension_numbers<[1], [0], [0], [1], [0, 0, 1, 1], [], []>} : vector<2x128xbf16>, vector<128x256xbf16>, vector<2x256xf32> -> vector<2x256xf32>
    %c0_3 = arith.constant 0 : index
    %c0_4 = arith.constant 0 : index
    %4 = vector.load %arg4[%c0_3, %c0_4] : memref<2x256xf32, #tpu.memory_space<vmem>>, vector<1x256xf32>
    %5 = vector.broadcast %4 : vector<1x256xf32> to vector<2x256xf32>
    %6 = arith.addf %3, %5 : vector<2x256xf32>
    %cst_5 = arith.constant 0.000000e+00 : f32
    %7 = vector.broadcast %cst_5 : f32 to vector<2x256xf32>
    %8 = arith.maximumf %6, %7 : vector<2x256xf32>
    %c0_6 = arith.constant 0 : index
    %c0_7 = arith.constant 0 : index
    %c0_8 = arith.constant 0 : index
    %9 = vector.load %arg3[%c0_6, %c0_7, %c0_8] : memref<1x256x256xbf16, #tpu.memory_space<vmem>>, vector<1x256x256xbf16>
    %10 = vector.shape_cast %9 : vector<1x256x256xbf16> to vector<256x256xbf16>
    %11 = arith.truncf %8 : vector<2x256xf32> to vector<2x256xbf16>
    %cst_9 = arith.constant dense<0.000000e+00> : vector<2x256xf32>
    %12 = tpu.matmul %11, %10, %cst_9 {dimension_numbers = #tpu.dot_dimension_numbers<[1], [0], [0], [1], [0, 0, 1, 1], [], []>} : vector<2x256xbf16>, vector<256x256xbf16>, vector<2x256xf32> -> vector<2x256xf32>
    %c1 = arith.constant 1 : index
    %c0_10 = arith.constant 0 : index
    %13 = vector.load %arg4[%c1, %c0_10] : memref<2x256xf32, #tpu.memory_space<vmem>>, vector<1x256xf32>
    %14 = vector.broadcast %13 : vector<1x256xf32> to vector<2x256xf32>
    %15 = arith.addf %12, %14 : vector<2x256xf32>
    %cst_11 = arith.constant 0.000000e+00 : f32
    %16 = vector.broadcast %cst_11 : f32 to vector<2x256xf32>
    %17 = arith.maximumf %15, %16 : vector<2x256xf32>
    %18 = arith.truncf %17 : vector<2x256xf32> to vector<2x256xbf16>
    %c0_12 = arith.constant 0 : index
    %c0_13 = arith.constant 0 : index
    %19 = vector.load %arg5[%c0_12, %c0_13] : memref<2x256xbf16, #tpu.memory_space<vmem>>, vector<2x256xbf16>
    tpu.vector_store %arg5[%c0_12, %c0_13], %18 {strides = array<i32>} : memref<2x256xbf16, #tpu.memory_space<vmem>>, vector<2x256xbf16>,
    return
  }
  func.func @transform_0(%arg0: i32) -> (i32, i32) {
    %c0_i32 = arith.constant 0 : i32
    %c0_i32_0 = arith.constant 0 : i32
    return %arg0, %c0_i32 : i32, i32
  }
  func.func @transform_1(%arg0: i32) -> (i32, i32) {
    %c0_i32 = arith.constant 0 : i32
    %c0_i32_0 = arith.constant 0 : i32
    %c0_i32_1 = arith.constant 0 : i32
    return %c0_i32, %c0_i32_0 : i32, i32
  }
  func.func @transform_2(%arg0: i32) -> (i32, i32, i32) {
    %c0_i32 = arith.constant 0 : i32
    %c0_i32_0 = arith.constant 0 : i32
    %c0_i32_1 = arith.constant 0 : i32
    %c0_i32_2 = arith.constant 0 : i32
    return %c0_i32, %c0_i32_0, %c0_i32_1 : i32, i32, i32
  }
  func.func @transform_3(%arg0: i32) -> (i32, i32) {
    %c0_i32 = arith.constant 0 : i32
    %c0_i32_0 = arith.constant 0 : i32
    %c0_i32_1 = arith.constant 0 : i32
    return %c0_i32, %c0_i32_0 : i32, i32
  }
  func.func @transform_4(%arg0: i32) -> (i32, i32) {
    %c0_i32 = arith.constant 0 : i32
    %c0_i32_0 = arith.constant 0 : i32
    return %arg0, %c0_i32 : i32, i32
  }
}

</mosaic_0001>

<llo_original>
// kernel: tpu_custom_call.1
$region0: #{tpu_custom_call.1}
  #allocation0 [shape = 'u32[]', space=smem, size = 0x4, offset = 0x4, fixed_abs, tag = 'smem constant byte address 0x4 - core index']
  #allocation1 [shape = 'u32[72,128]{1,0:T(1,128)}', space=vmem, size = 0x9000, scoped, tag = 'internal scratch']
  %s0 = inlined_call_operand.hbm [shape: f32[2,128], index: 0, kind: input, shape index: {}]
  %s1 = inlined_call_operand.hbm [shape: bf16[128,256], index: 1, kind: input, shape index: {}]
  %s2 = inlined_call_operand.hbm [shape: bf16[1,256,256], index: 2, kind: input, shape index: {}]
  %s3 = inlined_call_operand.hbm [shape: f32[2,256], index: 3, kind: input, shape index: {}]
  %s4 = inlined_call_operand.hbm [shape: bf16[2,256], index: 4, kind: output, shape index: {}]
  %s5 = sld [smem:[#allocation0]]
  $region42: #{tpu_custom_call.1} parent=0
    _
  %s7 = ssub.s32 1, %s5
  %s8 = scalar_select 0, %s7, %s5
  $region1: #{tpu_custom_call.1} parent=0
    #allocation2 [shape = 'u8[1024]{0}', space=vmem, size = 0x400, scoped, tag = 'input window, operand 0, single buffered']
    #allocation3 [shape = 's32[1]{0}', space=sflag, size = 0x4, scoped, tag = 'scoped memory for tpu_custom_call.1']
    #allocation4 [shape = 's32[1]{0}', space=sflag, size = 0x4, scoped, tag = 'scoped memory for tpu_custom_call.1']
    #allocation5 [shape = 'u8[65536]{0}', space=vmem, size = 0x10000, scoped, tag = 'input window, operand 1, single buffered']
    #allocation6 [shape = 's32[1]{0}', space=sflag, size = 0x4, scoped, tag = 'scoped memory for tpu_custom_call.1']
    #allocation7 [shape = 'u8[131072]{0}', space=vmem, size = 0x20000, scoped, tag = 'input window, operand 2, single buffered']
    #allocation8 [shape = 'u8[2048]{0}', space=vmem, size = 0x800, scoped, tag = 'input window, operand 3, single buffered']
    #allocation9 [shape = 's32[1]{0}', space=sflag, size = 0x4, scoped, tag = 'scoped memory for tpu_custom_call.1']
    #allocation10 [shape = 'u8[1024]{0}', space=vmem, size = 0x400, scoped, tag = 'output window, operand 0, single buffered']
    %9 = vsyncpa [#allocation3], 0
    %10 = vsyncpa [#allocation6], 0
    %11 = vsyncpa [#allocation9], 0
    %12 = vsyncpa [#allocation4], 0
    // Predicated region
    $region2: #{tpu_custom_call.1} parent=1 // pred_check
      _
    $region3: #{tpu_custom_call.1} parent=1 // pred_check_branch
      %14 = sbr.rel (0) target = $region5
    $region4: #{tpu_custom_call.1} parent=1 // pred_region
      %16 = vsyncadd [#allocation3], 0
      %s18 = sshll.u32 %s0, 4
      %s19 = int_to_ptr.hbm [resolvable:$true] %s18
      %s20 = sshll.u32 [#allocation2], 4
      %s21 = int_to_ptr.vmem [resolvable:$true] %s20
      %23 = dma.hbm_to_vmem [thread:$0]  %s19, 32, %s21, [#allocation3]
    $region5: #{tpu_custom_call.1} parent=1 // pred_fallthru
      _
    // Predicated region
    $region6: #{tpu_custom_call.1} parent=1 // pred_check
      _
    $region7: #{tpu_custom_call.1} parent=1 // pred_check_branch
      %25 = sbr.rel (0) target = $region9
    $region8: #{tpu_custom_call.1} parent=1 // pred_region
      %27 = vsyncadd [#allocation6], 0
      %s28 = sshll.u32 %s1, 4
      %s29 = int_to_ptr.hbm [resolvable:$true] %s28
      %s30 = sshll.u32 [#allocation5], 4
      %s31 = int_to_ptr.vmem [resolvable:$true] %s30
      %36 = dma.hbm_to_vmem [thread:$0]  %s29, 2048, %s31, [#allocation6], 128, 128, 8
    $region9: #{tpu_custom_call.1} parent=1 // pred_fallthru
      _
    // Predicated region
    $region10: #{tpu_custom_call.1} parent=1 // pred_check
      _
    $region11: #{tpu_custom_call.1} parent=1 // pred_check_branch
      %38 = sbr.rel (0) target = $region13
    $region12: #{tpu_custom_call.1} parent=1 // pred_region
      %40 = vsyncadd [#allocation6], 0
      %s41 = sshll.u32 %s2, 4
      %s42 = int_to_ptr.hbm [resolvable:$true] %s41
      %s43 = sshll.u32 [#allocation7], 4
      %s44 = int_to_ptr.vmem [resolvable:$true] %s43
      %49 = dma.hbm_to_vmem [thread:$0]  %s42, 4096, %s44, [#allocation6], 128, 128, 8
    $region13: #{tpu_custom_call.1} parent=1 // pred_fallthru
      _
    // Predicated region
    $region14: #{tpu_custom_call.1} parent=1 // pred_check
      _
    $region15: #{tpu_custom_call.1} parent=1 // pred_check_branch
      %51 = sbr.rel (0) target = $region17
    $region16: #{tpu_custom_call.1} parent=1 // pred_region
      %53 = vsyncadd [#allocation9], 0
      %s55 = sshll.u32 %s3, 4
      %s56 = int_to_ptr.hbm [resolvable:$true] %s55
      %s57 = sshll.u32 [#allocation8], 4
      %s58 = int_to_ptr.vmem [resolvable:$true] %s57
      %60 = dma.hbm_to_vmem [thread:$0]  %s56, 64, %s58, [#allocation9]
    $region17: #{tpu_custom_call.1} parent=1 // pred_fallthru
      _
    // Predicated region
    $region18: #{tpu_custom_call.1} parent=1 // pred_check
      _
    $region19: #{tpu_custom_call.1} parent=1 // pred_check_branch
      %62 = sbr.rel (0) target = $region21
    $region20: #{tpu_custom_call.1} parent=1 // pred_region
      %64 = dma.done [#allocation3], 32
    $region21: #{tpu_custom_call.1} parent=1 // pred_fallthru
      _
    // Predicated region
    $region22: #{tpu_custom_call.1} parent=1 // pred_check
      _
    $region23: #{tpu_custom_call.1} parent=1 // pred_check_branch
      %66 = sbr.rel (0) target = $region25
    $region24: #{tpu_custom_call.1} parent=1 // pred_region
      %68 = dma.done [#allocation6], 2048
    $region25: #{tpu_custom_call.1} parent=1 // pred_fallthru
      _
    // Predicated region
    $region26: #{tpu_custom_call.1} parent=1 // pred_check
      _
    $region27: #{tpu_custom_call.1} parent=1 // pred_check_branch
      %70 = sbr.rel (0) target = $region29
    $region28: #{tpu_custom_call.1} parent=1 // pred_region
      %72 = dma.done [#allocation6], 4096
    $region29: #{tpu_custom_call.1} parent=1 // pred_fallthru
      _
    // Predicated region
    $region30: #{tpu_custom_call.1} parent=1 // pred_check
      _
    $region31: #{tpu_custom_call.1} parent=1 // pred_check_branch
      %74 = sbr.rel (0) target = $region33
    $region32: #{tpu_custom_call.1} parent=1 // pred_region
      %76 = dma.done [#allocation9], 64
    $region33: #{tpu_custom_call.1} parent=1 // pred_fallthru
      _
    %v77 = vld [vmem:[#allocation2] sm:$0x3]
    %v78 = vld [vmem:[#allocation5] sm:$0xff]
    %v79 = vld [vmem:[#allocation5 + $0x8] sm:$0xff]
    %v80 = vld [vmem:[#allocation5 + $0x10] sm:$0xff]
    %v81 = vld [vmem:[#allocation5 + $0x18] sm:$0xff]
    %v82 = vld [vmem:[#allocation5 + $0x20] sm:$0xff]
    %v83 = vld [vmem:[#allocation5 + $0x28] sm:$0xff]
    %v84 = vld [vmem:[#allocation5 + $0x30] sm:$0xff]
    %v85 = vld [vmem:[#allocation5 + $0x38] sm:$0xff]
    %v86 = vld [vmem:[#allocation5 + $0x40] sm:$0xff]
    %v87 = vld [vmem:[#allocation5 + $0x48] sm:$0xff]
    %v88 = vld [vmem:[#allocation5 + $0x50] sm:$0xff]
    %v89 = vld [vmem:[#allocation5 + $0x58] sm:$0xff]
    %v90 = vld [vmem:[#allocation5 + $0x60] sm:$0xff]
    %v91 = vld [vmem:[#allocation5 + $0x68] sm:$0xff]
    %v92 = vld [vmem:[#allocation5 + $0x70] sm:$0xff]
    %v93 = vld [vmem:[#allocation5 + $0x78] sm:$0xff]
    %v94 = vpack.c.bf16 %v77, %v77
    %v95 = vld [vmem:[#allocation8] ss:$2 sm:$0x3]
    %v97 = vperm.slane %v95, 0
    %v98 = vperm.slane %v95, 1
    %v117 = vunpack.c.l.b16 %v78
    %v118 = vunpack.c.h.b16 %v78
    %v119 = vunpack.c.l.b16 %v79
    %v120 = vunpack.c.h.b16 %v79
    %v121 = vunpack.c.l.b16 %v80
    %v122 = vunpack.c.h.b16 %v80
    %v123 = vunpack.c.l.b16 %v81
    %v124 = vunpack.c.h.b16 %v81
    %v125 = vunpack.c.l.b16 %v82
    %v126 = vunpack.c.h.b16 %v82
    %v127 = vunpack.c.l.b16 %v83
    %v128 = vunpack.c.h.b16 %v83
    %v129 = vunpack.c.l.b16 %v84
    %v130 = vunpack.c.h.b16 %v84
    %v131 = vunpack.c.l.b16 %v85
    %v132 = vunpack.c.h.b16 %v85
    %v133 = vunpack.c.l.b16 %v86
    %v134 = vunpack.c.h.b16 %v86
    %v135 = vunpack.c.l.b16 %v87
    %v136 = vunpack.c.h.b16 %v87
    %v137 = vunpack.c.l.b16 %v88
    %v138 = vunpack.c.h.b16 %v88
    %v139 = vunpack.c.l.b16 %v89
    %v140 = vunpack.c.h.b16 %v89
    %v141 = vunpack.c.l.b16 %v90
    %v142 = vunpack.c.h.b16 %v90
    %v143 = vunpack.c.l.b16 %v91
    %v144 = vunpack.c.h.b16 %v91
    %v145 = vunpack.c.l.b16 %v92
    %v146 = vunpack.c.h.b16 %v92
    %v147 = vunpack.c.l.b16 %v93
    %v148 = vunpack.c.h.b16 %v93
    %v149 = vpack.c.b16 %v119, %v117
    %v150 = vpack.c.b16 %v120, %v118
    %v151 = vpack.c.b16 %v123, %v121
    %v152 = vpack.c.b16 %v124, %v122
    %v153 = vpack.c.b16 %v127, %v125
    %v154 = vpack.c.b16 %v128, %v126
    %v155 = vpack.c.b16 %v131, %v129
    %v156 = vpack.c.b16 %v132, %v130
    %v157 = vpack.c.b16 %v135, %v133
    %v158 = vpack.c.b16 %v136, %v134
    %v159 = vpack.c.b16 %v139, %v137
    %v160 = vpack.c.b16 %v140, %v138
    %v161 = vpack.c.b16 %v143, %v141
    %v162 = vpack.c.b16 %v144, %v142
    %v163 = vpack.c.b16 %v147, %v145
    %v164 = vpack.c.b16 %v148, %v146
    %181 = vmatpush.bf16.msra.mxu0 %v163
    %182 = vmatpush.bf16.msra.mxu0 %v161
    %183 = vmatpush.bf16.msra.mxu0 %v159
    %184 = vmatpush.bf16.msra.mxu0 %v157
    %185 = vmatpush.bf16.msra.mxu0 %v155
    %186 = vmatpush.bf16.msra.mxu0 %v153
    %187 = vmatpush.bf16.msra.mxu0 %v151
    %188 = vmatpush.bf16.msra.mxu0 %v149
    %189 = vmatmul.bf16.gmra.mxu0 %v94
    %v190 = vpop.f32.mrf.mxu0
    %v191 = vadd.f32 %v97, %v190
    %v192 = vpop.f32.mrf.mxu0
    %193 = vdwg.mxu0
    %194 = vmatpush.bf16.msra.mxu0 %v164
    %195 = vmatpush.bf16.msra.mxu0 %v162
    %196 = vmatpush.bf16.msra.mxu0 %v160
    %197 = vmatpush.bf16.msra.mxu0 %v158
    %198 = vmatpush.bf16.msra.mxu0 %v156
    %199 = vmatpush.bf16.msra.mxu0 %v154
    %200 = vmatpush.bf16.msra.mxu0 %v152
    %201 = vmatpush.bf16.msra.mxu0 %v150
    %202 = vmatmul.bf16.gmra.mxu0 %v94
    %v203 = vpop.f32.mrf.mxu0
    %v204 = vadd.f32 %v98, %v203
    %v205 = vpop.f32.mrf.mxu0
    %206 = vdwg.mxu0
    %v207 = vmax.f32 %v191, 0.0
    %v208 = vmax.f32 %v204, 0.0
    %v209 = vld [vmem:[#allocation7] sm:$0xff]
    %v210 = vld [vmem:[#allocation7 + $0x8] sm:$0xff]
    %v211 = vld [vmem:[#allocation7 + $0x10] sm:$0xff]
    %v212 = vld [vmem:[#allocation7 + $0x18] sm:$0xff]
    %v213 = vld [vmem:[#allocation7 + $0x20] sm:$0xff]
    %v214 = vld [vmem:[#allocation7 + $0x28] sm:$0xff]
    %v215 = vld [vmem:[#allocation7 + $0x30] sm:$0xff]
    %v216 = vld [vmem:[#allocation7 + $0x38] sm:$0xff]
    %v217 = vld [vmem:[#allocation7 + $0x40] sm:$0xff]
    %v218 = vld [vmem:[#allocation7 + $0x48] sm:$0xff]
    %v219 = vld [vmem:[#allocation7 + $0x50] sm:$0xff]
    %v220 = vld [vmem:[#allocation7 + $0x58] sm:$0xff]
    %v221 = vld [vmem:[#allocation7 + $0x60] sm:$0xff]
    %v222 = vld [vmem:[#allocation7 + $0x68] sm:$0xff]
    %v223 = vld [vmem:[#allocation7 + $0x70] sm:$0xff]
    %v224 = vld [vmem:[#allocation7 + $0x78] sm:$0xff]
    %v225 = vld [vmem:[#allocation7 + $0x80] sm:$0xff]
    %v226 = vld [vmem:[#allocation7 + $0x88] sm:$0xff]
    %v227 = vld [vmem:[#allocation7 + $0x90] sm:$0xff]
    %v228 = vld [vmem:[#allocation7 + $0x98] sm:$0xff]
    %v229 = vld [vmem:[#allocation7 + $0xa0] sm:$0xff]
    %v230 = vld [vmem:[#allocation7 + $0xa8] sm:$0xff]
    %v231 = vld [vmem:[#allocation7 + $0xb0] sm:$0xff]
    %v232 = vld [vmem:[#allocation7 + $0xb8] sm:$0xff]
    %v233 = vld [vmem:[#allocation7 + $0xc0] sm:$0xff]
    %v234 = vld [vmem:[#allocation7 + $0xc8] sm:$0xff]
    %v235 = vld [vmem:[#allocation7 + $0xd0] sm:$0xff]
    %v236 = vld [vmem:[#allocation7 + $0xd8] sm:$0xff]
    %v237 = vld [vmem:[#allocation7 + $0xe0] sm:$0xff]
    %v238 = vld [vmem:[#allocation7 + $0xe8] sm:$0xff]
    %v239 = vld [vmem:[#allocation7 + $0xf0] sm:$0xff]
    %v240 = vld [vmem:[#allocation7 + $0xf8] sm:$0xff]
    %v241 = vpack.c.bf16 %v207, %v207
    %v242 = vpack.c.bf16 %v208, %v208
    %s243 = scalar_lea.vmem [#allocation8], 1
    %v244 = vld [vmem:[%s243] ss:$2 sm:$0x3]
    %v246 = vperm.slane %v244, 0
    %v247 = vperm.slane %v244, 1
    %v282 = vunpack.c.l.b16 %v209
    %v283 = vunpack.c.h.b16 %v209
    %v284 = vunpack.c.l.b16 %v210
    %v285 = vunpack.c.h.b16 %v210
    %v286 = vunpack.c.l.b16 %v211
    %v287 = vunpack.c.h.b16 %v211
    %v288 = vunpack.c.l.b16 %v212
    %v289 = vunpack.c.h.b16 %v212
    %v290 = vunpack.c.l.b16 %v213
    %v291 = vunpack.c.h.b16 %v213
    %v292 = vunpack.c.l.b16 %v214
    %v293 = vunpack.c.h.b16 %v214
    %v294 = vunpack.c.l.b16 %v215
    %v295 = vunpack.c.h.b16 %v215
    %v296 = vunpack.c.l.b16 %v216
    %v297 = vunpack.c.h.b16 %v216
    %v298 = vunpack.c.l.b16 %v217
    %v299 = vunpack.c.h.b16 %v217
    %v300 = vunpack.c.l.b16 %v218
    %v301 = vunpack.c.h.b16 %v218
    %v302 = vunpack.c.l.b16 %v219
    %v303 = vunpack.c.h.b16 %v219
    %v304 = vunpack.c.l.b16 %v220
    %v305 = vunpack.c.h.b16 %v220
    %v306 = vunpack.c.l.b16 %v221
    %v307 = vunpack.c.h.b16 %v221
    %v308 = vunpack.c.l.b16 %v222
    %v309 = vunpack.c.h.b16 %v222
    %v310 = vunpack.c.l.b16 %v223
    %v311 = vunpack.c.h.b16 %v223
    %v312 = vunpack.c.l.b16 %v224
    %v313 = vunpack.c.h.b16 %v224
    %v314 = vunpack.c.l.b16 %v225
    %v315 = vunpack.c.h.b16 %v225
    %v316 = vunpack.c.l.b16 %v226
    %v317 = vunpack.c.h.b16 %v226
    %v318 = vunpack.c.l.b16 %v227
    %v319 = vunpack.c.h.b16 %v227
    %v320 = vunpack.c.l.b16 %v228
    %v321 = vunpack.c.h.b16 %v228
    %v322 = vunpack.c.l.b16 %v229
    %v323 = vunpack.c.h.b16 %v229
    %v324 = vunpack.c.l.b16 %v230
    %v325 = vunpack.c.h.b16 %v230
    %v326 = vunpack.c.l.b16 %v231
    %v327 = vunpack.c.h.b16 %v231
    %v328 = vunpack.c.l.b16 %v232
    %v329 = vunpack.c.h.b16 %v232
    %v330 = vunpack.c.l.b16 %v233
    %v331 = vunpack.c.h.b16 %v233
    %v332 = vunpack.c.l.b16 %v234
    %v333 = vunpack.c.h.b16 %v234
    %v334 = vunpack.c.l.b16 %v235
    %v335 = vunpack.c.h.b16 %v235
    %v336 = vunpack.c.l.b16 %v236
    %v337 = vunpack.c.h.b16 %v236
    %v338 = vunpack.c.l.b16 %v237
    %v339 = vunpack.c.h.b16 %v237
    %v340 = vunpack.c.l.b16 %v238
    %v341 = vunpack.c.h.b16 %v238
    %v342 = vunpack.c.l.b16 %v239
    %v343 = vunpack.c.h.b16 %v239
    %v344 = vunpack.c.l.b16 %v240
    %v345 = vunpack.c.h.b16 %v240
    %v346 = vpack.c.b16 %v284, %v282
    %v347 = vpack.c.b16 %v285, %v283
    %v348 = vpack.c.b16 %v288, %v286
    %v349 = vpack.c.b16 %v289, %v287
    %v350 = vpack.c.b16 %v292, %v290
    %v351 = vpack.c.b16 %v293, %v291
    %v352 = vpack.c.b16 %v296, %v294
    %v353 = vpack.c.b16 %v297, %v295
    %v354 = vpack.c.b16 %v300, %v298
    %v355 = vpack.c.b16 %v301, %v299
    %v356 = vpack.c.b16 %v304, %v302
    %v357 = vpack.c.b16 %v305, %v303
    %v358 = vpack.c.b16 %v308, %v306
    %v359 = vpack.c.b16 %v309, %v307
    %v360 = vpack.c.b16 %v312, %v310
    %v361 = vpack.c.b16 %v313, %v311
    %v362 = vpack.c.b16 %v316, %v314
    %v363 = vpack.c.b16 %v317, %v315
    %v364 = vpack.c.b16 %v320, %v318
    %v365 = vpack.c.b16 %v321, %v319
    %v366 = vpack.c.b16 %v324, %v322
    %v367 = vpack.c.b16 %v325, %v323
    %v368 = vpack.c.b16 %v328, %v326
    %v369 = vpack.c.b16 %v329, %v327
    %v370 = vpack.c.b16 %v332, %v330
    %v371 = vpack.c.b16 %v333, %v331
    %v372 = vpack.c.b16 %v336, %v334
    %v373 = vpack.c.b16 %v337, %v335
    %v374 = vpack.c.b16 %v340, %v338
    %v375 = vpack.c.b16 %v341, %v339
    %v376 = vpack.c.b16 %v344, %v342
    %v377 = vpack.c.b16 %v345, %v343
    %410 = vmatpush.bf16.msra.mxu0 %v360
    %411 = vmatpush.bf16.msra.mxu0 %v358
    %412 = vmatpush.bf16.msra.mxu0 %v356
    %413 = vmatpush.bf16.msra.mxu0 %v354
    %414 = vmatpush.bf16.msra.mxu0 %v352
    %415 = vmatpush.bf16.msra.mxu0 %v350
    %416 = vmatpush.bf16.msra.mxu0 %v348
    %417 = vmatpush.bf16.msra.mxu0 %v346
    %418 = vmatmul.bf16.gmra.mxu0 %v241
    %v419 = vpop.f32.mrf.mxu0
    %v420 = vadd.f32 %v246, %v419
    %v421 = vpop.f32.mrf.mxu0
    %422 = vdwg.mxu0
    %423 = vmatpush.bf16.msra.mxu0 %v376
    %424 = vmatpush.bf16.msra.mxu0 %v374
    %425 = vmatpush.bf16.msra.mxu0 %v372
    %426 = vmatpush.bf16.msra.mxu0 %v370
    %427 = vmatpush.bf16.msra.mxu0 %v368
    %428 = vmatpush.bf16.msra.mxu0 %v366
    %429 = vmatpush.bf16.msra.mxu0 %v364
    %430 = vmatpush.bf16.msra.mxu0 %v362
    %431 = vmatmul.bf16.gmra.mxu0 %v242
    %v432 = vpop.f32.mrf.mxu0
    %v433 = vadd.f32 %v420, %v432
    %v434 = vpop.f32.mrf.mxu0
    %435 = vdwg.mxu0
    %436 = vmatpush.bf16.msra.mxu0 %v361
    %437 = vmatpush.bf16.msra.mxu0 %v359
    %438 = vmatpush.bf16.msra.mxu0 %v357
    %439 = vmatpush.bf16.msra.mxu0 %v355
    %440 = vmatpush.bf16.msra.mxu0 %v353
    %441 = vmatpush.bf16.msra.mxu0 %v351
    %442 = vmatpush.bf16.msra.mxu0 %v349
    %443 = vmatpush.bf16.msra.mxu0 %v347
    %444 = vmatmul.bf16.gmra.mxu0 %v241
    %v445 = vpop.f32.mrf.mxu0
    %v446 = vadd.f32 %v247, %v445
    %v447 = vpop.f32.mrf.mxu0
    %448 = vdwg.mxu0
    %449 = vmatpush.bf16.msra.mxu0 %v377
    %450 = vmatpush.bf16.msra.mxu0 %v375
    %451 = vmatpush.bf16.msra.mxu0 %v373
    %452 = vmatpush.bf16.msra.mxu0 %v371
    %453 = vmatpush.bf16.msra.mxu0 %v369
    %454 = vmatpush.bf16.msra.mxu0 %v367
    %455 = vmatpush.bf16.msra.mxu0 %v365
    %456 = vmatpush.bf16.msra.mxu0 %v363
    %457 = vmatmul.bf16.gmra.mxu0 %v242
    %v458 = vpop.f32.mrf.mxu0
    %v459 = vadd.f32 %v446, %v458
    %v460 = vpop.f32.mrf.mxu0
    %461 = vdwg.mxu0
    %v462 = vmax.f32 %v433, 0.0
    %v463 = vmax.f32 %v459, 0.0
    %v464 = vpack.c.bf16 %v463, %v462
    %v466 = vrot.slane %v464, 3
    %vm467 = vcmask 1040384
    %v470 = vsel %vm467, %v464, %v466
    %472 = vst [vmem:[#allocation10] sm:$0x3] %v470
    // Predicated region
    $region34: #{tpu_custom_call.1} parent=1 // pred_check
      _
    $region35: #{tpu_custom_call.1} parent=1 // pred_check_branch
      %474 = sbr.rel (0) target = $region37
    $region36: #{tpu_custom_call.1} parent=1 // pred_region
      %476 = vsyncadd [#allocation4], 0
      %s478 = sshll.u32 [#allocation10], 4
      %s479 = int_to_ptr.vmem [resolvable:$true] %s478
      %s480 = sshll.u32 %s4, 4
      %s481 = int_to_ptr.hbm [resolvable:$true] %s480
      %483 = dma.vmem_to_hbm [thread:$0]  %s479, 32, %s481, [#allocation4]
    $region37: #{tpu_custom_call.1} parent=1 // pred_fallthru
      _
    // Predicated region
    $region38: #{tpu_custom_call.1} parent=1 // pred_check
      _
    $region39: #{tpu_custom_call.1} parent=1 // pred_check_branch
      %485 = sbr.rel (0) target = $region41
    $region40: #{tpu_custom_call.1} parent=1 // pred_region
      %487 = dma.done [#allocation4], 32
    $region41: #{tpu_custom_call.1} parent=1 // pred_fallthru
      _
    %488 = vsyncpa [#allocation3], 1
    %489 = vsyncpa [#allocation6], 1
    %490 = vsyncpa [#allocation9], 1
    %491 = vsyncpa [#allocation4], 1

// kernel: tpu_custom_call.1
$region0: #{tpu_custom_call.1}
  #allocation0 [shape = 'u32[]', space=smem, size = 0x4, offset = 0x4, fixed_abs, tag = 'smem constant byte address 0x4 - core index']
  #allocation1 [shape = 'u32[72,128]{1,0:T(1,128)}', space=vmem, size = 0x9000, scoped, tag = 'internal scratch']
  %s0 = inlined_call_operand.hbm [shape: f32[2,128], index: 0, kind: input, shape index: {}]
  %s1 = inlined_call_operand.hbm [shape: bf16[128,256], index: 1, kind: input, shape index: {}]
  %s2 = inlined_call_operand.hbm [shape: bf16[1,256,256], index: 2, kind: input, shape index: {}]
  %s3 = inlined_call_operand.hbm [shape: f32[2,256], index: 3, kind: input, shape index: {}]
  %s4 = inlined_call_operand.hbm [shape: bf16[2,256], index: 4, kind: output, shape index: {}]
  %s5 = sld [smem:[#allocation0]]
  $region42: #{tpu_custom_call.1} parent=0
    _
  %s7 = ssub.s32 1, %s5
  %s8 = scalar_select 0, %s7, %s5
  $region1: #{tpu_custom_call.1} parent=0
    #allocation2 [shape = 'u8[1024]{0}', space=vmem, size = 0x400, scoped, tag = 'input window, operand 0, single buffered']
    #allocation3 [shape = 's32[1]{0}', space=sflag, size = 0x4, scoped, tag = 'scoped memory for tpu_custom_call.1']
    #allocation4 [shape = 's32[1]{0}', space=sflag, size = 0x4, scoped, tag = 'scoped memory for tpu_custom_call.1']
    #allocation5 [shape = 'u8[65536]{0}', space=vmem, size = 0x10000, scoped, tag = 'input window, operand 1, single buffered']
    #allocation6 [shape = 's32[1]{0}', space=sflag, size = 0x4, scoped, tag = 'scoped memory for tpu_custom_call.1']
    #allocation7 [shape = 'u8[131072]{0}', space=vmem, size = 0x20000, scoped, tag = 'input window, operand 2, single buffered']
    #allocation8 [shape = 'u8[2048]{0}', space=vmem, size = 0x800, scoped, tag = 'input window, operand 3, single buffered']
    #allocation9 [shape = 's32[1]{0}', space=sflag, size = 0x4, scoped, tag = 'scoped memory for tpu_custom_call.1']
    #allocation10 [shape = 'u8[1024]{0}', space=vmem, size = 0x400, scoped, tag = 'output window, operand 0, single buffered']
    %9 = vsyncpa [#allocation3], 0
    %10 = vsyncpa [#allocation6], 0
    %11 = vsyncpa [#allocation9], 0
    %12 = vsyncpa [#allocation4], 0
    // Predicated region
    $region2: #{tpu_custom_call.1} parent=1 // pred_check
      _
    $region3: #{tpu_custom_call.1} parent=1 // pred_check_branch
      %14 = sbr.rel (0) target = $region5
    $region4: #{tpu_custom_call.1} parent=1 // pred_region
      %16 = vsyncadd [#allocation3], 0
      %s18 = sshll.u32 %s0, 4
      %s19 = int_to_ptr.hbm [resolvable:$true] %s18
      %s20 = sshll.u32 [#allocation2], 4
      %s21 = int_to_ptr.vmem [resolvable:$true] %s20
      %23 = dma.hbm_to_vmem [thread:$0]  %s19, 32, %s21, [#allocation3]
    $region5: #{tpu_custom_call.1} parent=1 // pred_fallthru
      _
    // Predicated region
    $region6: #{tpu_custom_call.1} parent=1 // pred_check
      _
    $region7: #{tpu_custom_call.1} parent=1 // pred_check_branch
      %25 = sbr.rel (0) target = $region9
    $region8: #{tpu_custom_call.1} parent=1 // pred_region
      %27 = vsyncadd [#allocation6], 0
      %s28 = sshll.u32 %s1, 4
      %s29 = int_to_ptr.hbm [resolvable:$true] %s28
      %s30 = sshll.u32 [#allocation5], 4
      %s31 = int_to_ptr.vmem [resolvable:$true] %s30
      %36 = dma.hbm_to_vmem [thread:$0]  %s29, 2048, %s31, [#allocation6], 128, 128, 8
    $region9: #{tpu_custom_call.1} parent=1 // pred_fallthru
      _
    // Predicated region
    $region10: #{tpu_custom_call.1} parent=1 // pred_check
      _
    $region11: #{tpu_custom_call.1} parent=1 // pred_check_branch
      %38 = sbr.rel (0) target = $region13
    $region12: #{tpu_custom_call.1} parent=1 // pred_region
      %40 = vsyncadd [#allocation6], 0
      %s41 = sshll.u32 %s2, 4
      %s42 = int_to_ptr.hbm [resolvable:$true] %s41
      %s43 = sshll.u32 [#allocation7], 4
      %s44 = int_to_ptr.vmem [resolvable:$true] %s43
      %49 = dma.hbm_to_vmem [thread:$0]  %s42, 4096, %s44, [#allocation6], 128, 128, 8
    $region13: #{tpu_custom_call.1} parent=1 // pred_fallthru
      _
    // Predicated region
    $region14: #{tpu_custom_call.1} parent=1 // pred_check
      _
    $region15: #{tpu_custom_call.1} parent=1 // pred_check_branch
      %51 = sbr.rel (0) target = $region17
    $region16: #{tpu_custom_call.1} parent=1 // pred_region
      %53 = vsyncadd [#allocation9], 0
      %s55 = sshll.u32 %s3, 4
      %s56 = int_to_ptr.hbm [resolvable:$true] %s55
      %s57 = sshll.u32 [#allocation8], 4
      %s58 = int_to_ptr.vmem [resolvable:$true] %s57
      %60 = dma.hbm_to_vmem [thread:$0]  %s56, 64, %s58, [#allocation9]
    $region17: #{tpu_custom_call.1} parent=1 // pred_fallthru
      _
    // Predicated region
    $region18: #{tpu_custom_call.1} parent=1 // pred_check
      _
    $region19: #{tpu_custom_call.1} parent=1 // pred_check_branch
      %62 = sbr.rel (0) target = $region21
    $region20: #{tpu_custom_call.1} parent=1 // pred_region
      %64 = dma.done [#allocation3], 32
    $region21: #{tpu_custom_call.1} parent=1 // pred_fallthru
      _
    // Predicated region
    $region22: #{tpu_custom_call.1} parent=1 // pred_check
      _
    $region23: #{tpu_custom_call.1} parent=1 // pred_check_branch
      %66 = sbr.rel (0) target = $region25
    $region24: #{tpu_custom_call.1} parent=1 // pred_region
      %68 = dma.done [#allocation6], 2048
    $region25: #{tpu_custom_call.1} parent=1 // pred_fallthru
      _
    // Predicated region
    $region26: #{tpu_custom_call.1} parent=1 // pred_check
      _
    $region27: #{tpu_custom_call.1} parent=1 // pred_check_branch
      %70 = sbr.rel (0) target = $region29
    $region28: #{tpu_custom_call.1} parent=1 // pred_region
      %72 = dma.done [#allocation6], 4096
    $region29: #{tpu_custom_call.1} parent=1 // pred_fallthru
      _
    // Predicated region
    $region30: #{tpu_custom_call.1} parent=1 // pred_check
      _
    $region31: #{tpu_custom_call.1} parent=1 // pred_check_branch
      %74 = sbr.rel (0) target = $region33
    $region32: #{tpu_custom_call.1} parent=1 // pred_region
      %76 = dma.done [#allocation9], 64
    $region33: #{tpu_custom_call.1} parent=1 // pred_fallthru
      _
    %v77 = vld [vmem:[#allocation2] sm:$0x3]
    %v78 = vld [vmem:[#allocation5] sm:$0xff]
    %v79 = vld [vmem:[#allocation5 + $0x8] sm:$0xff]
    %v80 = vld [vmem:[#allocation5 + $0x10] sm:$0xff]
    %v81 = vld [vmem:[#allocation5 + $0x18] sm:$0xff]
    %v82 = vld [vmem:[#allocation5 + $0x20] sm:$0xff]
    %v83 = vld [vmem:[#allocation5 + $0x28] sm:$0xff]
    %v84 = vld [vmem:[#allocation5 + $0x30] sm:$0xff]
    %v85 = vld [vmem:[#allocation5 + $0x38] sm:$0xff]
    %v86 = vld [vmem:[#allocation5 + $0x40] sm:$0xff]
    %v87 = vld [vmem:[#allocation5 + $0x48] sm:$0xff]
    %v88 = vld [vmem:[#allocation5 + $0x50] sm:$0xff]
    %v89 = vld [vmem:[#allocation5 + $0x58] sm:$0xff]
    %v90 = vld [vmem:[#allocation5 + $0x60] sm:$0xff]
    %v91 = vld [vmem:[#allocation5 + $0x68] sm:$0xff]
    %v92 = vld [vmem:[#allocation5 + $0x70] sm:$0xff]
    %v93 = vld [vmem:[#allocation5 + $0x78] sm:$0xff]
    %v94 = vpack.c.bf16 %v77, %v77
    %v95 = vld [vmem:[#allocation8] ss:$2 sm:$0x3]
    %v97 = vperm.slane %v95, 0
    %v98 = vperm.slane %v95, 1
    %v117 = vunpack.c.l.b16 %v78
    %v118 = vunpack.c.h.b16 %v78
    %v119 = vunpack.c.l.b16 %v79
    %v120 = vunpack.c.h.b16 %v79
    %v121 = vunpack.c.l.b16 %v80
    %v122 = vunpack.c.h.b16 %v80
    %v123 = vunpack.c.l.b16 %v81
    %v124 = vunpack.c.h.b16 %v81
    %v125 = vunpack.c.l.b16 %v82
    %v126 = vunpack.c.h.b16 %v82
    %v127 = vunpack.c.l.b16 %v83
    %v128 = vunpack.c.h.b16 %v83
    %v129 = vunpack.c.l.b16 %v84
    %v130 = vunpack.c.h.b16 %v84
    %v131 = vunpack.c.l.b16 %v85
    %v132 = vunpack.c.h.b16 %v85
    %v133 = vunpack.c.l.b16 %v86
    %v134 = vunpack.c.h.b16 %v86
    %v135 = vunpack.c.l.b16 %v87
    %v136 = vunpack.c.h.b16 %v87
    %v137 = vunpack.c.l.b16 %v88
    %v138 = vunpack.c.h.b16 %v88
    %v139 = vunpack.c.l.b16 %v89
    %v140 = vunpack.c.h.b16 %v89
    %v141 = vunpack.c.l.b16 %v90
    %v142 = vunpack.c.h.b16 %v90
    %v143 = vunpack.c.l.b16 %v91
    %v144 = vunpack.c.h.b16 %v91
    %v145 = vunpack.c.l.b16 %v92
    %v146 = vunpack.c.h.b16 %v92
    %v147 = vunpack.c.l.b16 %v93
    %v148 = vunpack.c.h.b16 %v93
    %v149 = vpack.c.b16 %v119, %v117
    %v150 = vpack.c.b16 %v120, %v118
    %v151 = vpack.c.b16 %v123, %v121
    %v152 = vpack.c.b16 %v124, %v122
    %v153 = vpack.c.b16 %v127, %v125
    %v154 = vpack.c.b16 %v128, %v126
    %v155 = vpack.c.b16 %v131, %v129
    %v156 = vpack.c.b16 %v132, %v130
    %v157 = vpack.c.b16 %v135, %v133
    %v158 = vpack.c.b16 %v136, %v134
    %v159 = vpack.c.b16 %v139, %v137
    %v160 = vpack.c.b16 %v140, %v138
    %v161 = vpack.c.b16 %v143, %v141
    %v162 = vpack.c.b16 %v144, %v142
    %v163 = vpack.c.b16 %v147, %v145
    %v164 = vpack.c.b16 %v148, %v146
    %181 = vmatpush.bf16.msra.mxu0 %v163
    %182 = vmatpush.bf16.msra.mxu0 %v161
    %183 = vmatpush.bf16.msra.mxu0 %v159
    %184 = vmatpush.bf16.msra.mxu0 %v157
    %185 = vmatpush.bf16.msra.mxu0 %v155
    %186 = vmatpush.bf16.msra.mxu0 %v153
    %187 = vmatpush.bf16.msra.mxu0 %v151
    %188 = vmatpush.bf16.msra.mxu0 %v149
    %189 = vmatmul.bf16.gmra.mxu0 %v94
    %v190 = vpop.f32.mrf.mxu0
    %v191 = vadd.f32 %v97, %v190
    %v192 = vpop.f32.mrf.mxu0
    %193 = vdwg.mxu0
    %194 = vmatpush.bf16.msra.mxu0 %v164
    %195 = vmatpush.bf16.msra.mxu0 %v162
    %196 = vmatpush.bf16.msra.mxu0 %v160
    %197 = vmatpush.bf16.msra.mxu0 %v158
    %198 = vmatpush.bf16.msra.mxu0 %v156
    %199 = vmatpush.bf16.msra.mxu0 %v154
    %200 = vmatpush.bf16.msra.mxu0 %v152
    %201 = vmatpush.bf16.msra.mxu0 %v150
    %202 = vmatmul.bf16.gmra.mxu0 %v94
    %v203 = vpop.f32.mrf.mxu0
    %v204 = vadd.f32 %v98, %v203
    %v205 = vpop.f32.mrf.mxu0
    %206 = vdwg.mxu0
    %v207 = vmax.f32 %v191, 0.0
    %v208 = vmax.f32 %v204, 0.0
    %v209 = vld [vmem:[#allocation7] sm:$0xff]
    %v210 = vld [vmem:[#allocation7 + $0x8] sm:$0xff]
    %v211 = vld [vmem:[#allocation7 + $0x10] sm:$0xff]
    %v212 = vld [vmem:[#allocation7 + $0x18] sm:$0xff]
    %v213 = vld [vmem:[#allocation7 + $0x20] sm:$0xff]
    %v214 = vld [vmem:[#allocation7 + $0x28] sm:$0xff]
    %v215 = vld [vmem:[#allocation7 + $0x30] sm:$0xff]
    %v216 = vld [vmem:[#allocation7 + $0x38] sm:$0xff]
    %v217 = vld [vmem:[#allocation7 + $0x40] sm:$0xff]
    %v218 = vld [vmem:[#allocation7 + $0x48] sm:$0xff]
    %v219 = vld [vmem:[#allocation7 + $0x50] sm:$0xff]
    %v220 = vld [vmem:[#allocation7 + $0x58] sm:$0xff]
    %v221 = vld [vmem:[#allocation7 + $0x60] sm:$0xff]
    %v222 = vld [vmem:[#allocation7 + $0x68] sm:$0xff]
    %v223 = vld [vmem:[#allocation7 + $0x70] sm:$0xff]
    %v224 = vld [vmem:[#allocation7 + $0x78] sm:$0xff]
    %v225 = vld [vmem:[#allocation7 + $0x80] sm:$0xff]
    %v226 = vld [vmem:[#allocation7 + $0x88] sm:$0xff]
    %v227 = vld [vmem:[#allocation7 + $0x90] sm:$0xff]
    %v228 = vld [vmem:[#allocation7 + $0x98] sm:$0xff]
    %v229 = vld [vmem:[#allocation7 + $0xa0] sm:$0xff]
    %v230 = vld [vmem:[#allocation7 + $0xa8] sm:$0xff]
    %v231 = vld [vmem:[#allocation7 + $0xb0] sm:$0xff]
    %v232 = vld [vmem:[#allocation7 + $0xb8] sm:$0xff]
    %v233 = vld [vmem:[#allocation7 + $0xc0] sm:$0xff]
    %v234 = vld [vmem:[#allocation7 + $0xc8] sm:$0xff]
    %v235 = vld [vmem:[#allocation7 + $0xd0] sm:$0xff]
    %v236 = vld [vmem:[#allocation7 + $0xd8] sm:$0xff]
    %v237 = vld [vmem:[#allocation7 + $0xe0] sm:$0xff]
    %v238 = vld [vmem:[#allocation7 + $0xe8] sm:$0xff]
    %v239 = vld [vmem:[#allocation7 + $0xf0] sm:$0xff]
    %v240 = vld [vmem:[#allocation7 + $0xf8] sm:$0xff]
    %v241 = vpack.c.bf16 %v207, %v207
    %v242 = vpack.c.bf16 %v208, %v208
    %s243 = scalar_lea.vmem [#allocation8], 1
    %v244 = vld [vmem:[%s243] ss:$2 sm:$0x3]
    %v246 = vperm.slane %v244, 0
    %v247 = vperm.slane %v244, 1
    %v282 = vunpack.c.l.b16 %v209
    %v283 = vunpack.c.h.b16 %v209
    %v284 = vunpack.c.l.b16 %v210
    %v285 = vunpack.c.h.b16 %v210
    %v286 = vunpack.c.l.b16 %v211
    %v287 = vunpack.c.h.b16 %v211
    %v288 = vunpack.c.l.b16 %v212
    %v289 = vunpack.c.h.b16 %v212
    %v290 = vunpack.c.l.b16 %v213
    %v291 = vunpack.c.h.b16 %v213
    %v292 = vunpack.c.l.b16 %v214
    %v293 = vunpack.c.h.b16 %v214
    %v294 = vunpack.c.l.b16 %v215
    %v295 = vunpack.c.h.b16 %v215
    %v296 = vunpack.c.l.b16 %v216
    %v297 = vunpack.c.h.b16 %v216
    %v298 = vunpack.c.l.b16 %v217
    %v299 = vunpack.c.h.b16 %v217
    %v300 = vunpack.c.l.b16 %v218
    %v301 = vunpack.c.h.b16 %v218
    %v302 = vunpack.c.l.b16 %v219
    %v303 = vunpack.c.h.b16 %v219
    %v304 = vunpack.c.l.b16 %v220
    %v305 = vunpack.c.h.b16 %v220
    %v306 = vunpack.c.l.b16 %v221
    %v307 = vunpack.c.h.b16 %v221
    %v308 = vunpack.c.l.b16 %v222
    %v309 = vunpack.c.h.b16 %v222
    %v310 = vunpack.c.l.b16 %v223
    %v311 = vunpack.c.h.b16 %v223
    %v312 = vunpack.c.l.b16 %v224
    %v313 = vunpack.c.h.b16 %v224
    %v314 = vunpack.c.l.b16 %v225
    %v315 = vunpack.c.h.b16 %v225
    %v316 = vunpack.c.l.b16 %v226
    %v317 = vunpack.c.h.b16 %v226
    %v318 = vunpack.c.l.b16 %v227
    %v319 = vunpack.c.h.b16 %v227
    %v320 = vunpack.c.l.b16 %v228
    %v321 = vunpack.c.h.b16 %v228
    %v322 = vunpack.c.l.b16 %v229
    %v323 = vunpack.c.h.b16 %v229
    %v324 = vunpack.c.l.b16 %v230
    %v325 = vunpack.c.h.b16 %v230
    %v326 = vunpack.c.l.b16 %v231
    %v327 = vunpack.c.h.b16 %v231
    %v328 = vunpack.c.l.b16 %v232
    %v329 = vunpack.c.h.b16 %v232
    %v330 = vunpack.c.l.b16 %v233
    %v331 = vunpack.c.h.b16 %v233
    %v332 = vunpack.c.l.b16 %v234
    %v333 = vunpack.c.h.b16 %v234
    %v334 = vunpack.c.l.b16 %v235
    %v335 = vunpack.c.h.b16 %v235
    %v336 = vunpack.c.l.b16 %v236
    %v337 = vunpack.c.h.b16 %v236
    %v338 = vunpack.c.l.b16 %v237
    %v339 = vunpack.c.h.b16 %v237
    %v340 = vunpack.c.l.b16 %v238
    %v341 = vunpack.c.h.b16 %v238
    %v342 = vunpack.c.l.b16 %v239
    %v343 = vunpack.c.h.b16 %v239
    %v344 = vunpack.c.l.b16 %v240
    %v345 = vunpack.c.h.b16 %v240
    %v346 = vpack.c.b16 %v284, %v282
    %v347 = vpack.c.b16 %v285, %v283
    %v348 = vpack.c.b16 %v288, %v286
    %v349 = vpack.c.b16 %v289, %v287
    %v350 = vpack.c.b16 %v292, %v290
    %v351 = vpack.c.b16 %v293, %v291
    %v352 = vpack.c.b16 %v296, %v294
    %v353 = vpack.c.b16 %v297, %v295
    %v354 = vpack.c.b16 %v300, %v298
    %v355 = vpack.c.b16 %v301, %v299
    %v356 = vpack.c.b16 %v304, %v302
    %v357 = vpack.c.b16 %v305, %v303
    %v358 = vpack.c.b16 %v308, %v306
    %v359 = vpack.c.b16 %v309, %v307
    %v360 = vpack.c.b16 %v312, %v310
    %v361 = vpack.c.b16 %v313, %v311
    %v362 = vpack.c.b16 %v316, %v314
    %v363 = vpack.c.b16 %v317, %v315
    %v364 = vpack.c.b16 %v320, %v318
    %v365 = vpack.c.b16 %v321, %v319
    %v366 = vpack.c.b16 %v324, %v322
    %v367 = vpack.c.b16 %v325, %v323
    %v368 = vpack.c.b16 %v328, %v326
    %v369 = vpack.c.b16 %v329, %v327
    %v370 = vpack.c.b16 %v332, %v330
    %v371 = vpack.c.b16 %v333, %v331
    %v372 = vpack.c.b16 %v336, %v334
    %v373 = vpack.c.b16 %v337, %v335
    %v374 = vpack.c.b16 %v340, %v338
    %v375 = vpack.c.b16 %v341, %v339
    %v376 = vpack.c.b16 %v344, %v342
    %v377 = vpack.c.b16 %v345, %v343
    %410 = vmatpush.bf16.msra.mxu0 %v360
    %411 = vmatpush.bf16.msra.mxu0 %v358
    %412 = vmatpush.bf16.msra.mxu0 %v356
    %413 = vmatpush.bf16.msra.mxu0 %v354
    %414 = vmatpush.bf16.msra.mxu0 %v352
    %415 = vmatpush.bf16.msra.mxu0 %v350
    %416 = vmatpush.bf16.msra.mxu0 %v348
    %417 = vmatpush.bf16.msra.mxu0 %v346
    %418 = vmatmul.bf16.gmra.mxu0 %v241
    %v419 = vpop.f32.mrf.mxu0
    %v420 = vadd.f32 %v246, %v419
    %v421 = vpop.f32.mrf.mxu0
    %422 = vdwg.mxu0
    %423 = vmatpush.bf16.msra.mxu0 %v376
    %424 = vmatpush.bf16.msra.mxu0 %v374
    %425 = vmatpush.bf16.msra.mxu0 %v372
    %426 = vmatpush.bf16.msra.mxu0 %v370
    %427 = vmatpush.bf16.msra.mxu0 %v368
    %428 = vmatpush.bf16.msra.mxu0 %v366
    %429 = vmatpush.bf16.msra.mxu0 %v364
    %430 = vmatpush.bf16.msra.mxu0 %v362
    %431 = vmatmul.bf16.gmra.mxu0 %v242
    %v432 = vpop.f32.mrf.mxu0
    %v433 = vadd.f32 %v420, %v432
    %v434 = vpop.f32.mrf.mxu0
    %435 = vdwg.mxu0
    %436 = vmatpush.bf16.msra.mxu0 %v361
    %437 = vmatpush.bf16.msra.mxu0 %v359
    %438 = vmatpush.bf16.msra.mxu0 %v357
    %439 = vmatpush.bf16.msra.mxu0 %v355
    %440 = vmatpush.bf16.msra.mxu0 %v353
    %441 = vmatpush.bf16.msra.mxu0 %v351
    %442 = vmatpush.bf16.msra.mxu0 %v349
    %443 = vmatpush.bf16.msra.mxu0 %v347
    %444 = vmatmul.bf16.gmra.mxu0 %v241
    %v445 = vpop.f32.mrf.mxu0
    %v446 = vadd.f32 %v247, %v445
    %v447 = vpop.f32.mrf.mxu0
    %448 = vdwg.mxu0
    %449 = vmatpush.bf16.msra.mxu0 %v377
    %450 = vmatpush.bf16.msra.mxu0 %v375
    %451 = vmatpush.bf16.msra.mxu0 %v373
    %452 = vmatpush.bf16.msra.mxu0 %v371
    %453 = vmatpush.bf16.msra.mxu0 %v369
    %454 = vmatpush.bf16.msra.mxu0 %v367
    %455 = vmatpush.bf16.msra.mxu0 %v365
    %456 = vmatpush.bf16.msra.mxu0 %v363
    %457 = vmatmul.bf16.gmra.mxu0 %v242
    %v458 = vpop.f32.mrf.mxu0
    %v459 = vadd.f32 %v446, %v458
    %v460 = vpop.f32.mrf.mxu0
    %461 = vdwg.mxu0
    %v462 = vmax.f32 %v433, 0.0
    %v463 = vmax.f32 %v459, 0.0
    %v464 = vpack.c.bf16 %v463, %v462
    %v466 = vrot.slane %v464, 3
    %vm467 = vcmask 1040384
    %v470 = vsel %vm467, %v464, %v466
    %472 = vst [vmem:[#allocation10] sm:$0x3] %v470
    // Predicated region
    $region34: #{tpu_custom_call.1} parent=1 // pred_check
      _
    $region35: #{tpu_custom_call.1} parent=1 // pred_check_branch
      %474 = sbr.rel (0) target = $region37
    $region36: #{tpu_custom_call.1} parent=1 // pred_region
      %476 = vsyncadd [#allocation4], 0
      %s478 = sshll.u32 [#allocation10], 4
      %s479 = int_to_ptr.vmem [resolvable:$true] %s478
      %s480 = sshll.u32 %s4, 4
      %s481 = int_to_ptr.hbm [resolvable:$true] %s480
      %483 = dma.vmem_to_hbm [thread:$0]  %s479, 32, %s481, [#allocation4]
    $region37: #{tpu_custom_call.1} parent=1 // pred_fallthru
      _
    // Predicated region
    $region38: #{tpu_custom_call.1} parent=1 // pred_check
      _
    $region39: #{tpu_custom_call.1} parent=1 // pred_check_branch
      %485 = sbr.rel (0) target = $region41
    $region40: #{tpu_custom_call.1} parent=1 // pred_region
      %487 = dma.done [#allocation4], 32
    $region41: #{tpu_custom_call.1} parent=1 // pred_fallthru
      _
    %488 = vsyncpa [#allocation3], 1
    %489 = vsyncpa [#allocation6], 1
    %490 = vsyncpa [#allocation9], 1
    %491 = vsyncpa [#allocation4], 1

</llo_original>
